<compile_context>
chip_gen: v7x
topology: tpu7x:2x2x1
jax: 0.10.0
libtpu: 0.0.40
codegen_flags: <defaults>
</compile_context>

<pallas_src>
import math

import jax
import jax.numpy as jnp
from jax.experimental import pallas as pl
from jax.experimental.pallas import tpu as pltpu


def _concat_last_dim_kernel(*refs):
    """refs = (*in_refs, out_ref); each is a (rows_tile, W_i)/(rows_tile, W_total) VMEM tile.

    Build the concatenated tile in registers, then store it with one dense
    write per output vreg (no per-input masked partial stores).
    """
    in_refs = refs[:-1]
    out_ref = refs[-1]
    out_ref[...] = jnp.concatenate([r[...] for r in in_refs], axis=-1)


def _sublane_multiple(dtype) -> int:
    """Native sublane packing multiple for a dtype (8 for f32, 16 for bf16, 32 for i8)."""
    itemsize = jnp.dtype(dtype).itemsize
    return max(8, 32 // max(itemsize, 1))


def concatenate(xs, *, vmem_stage_budget_bytes=8 * 1024 * 1024):
    """Pallas equivalent of torch.cat(xs, dim=-1).

    All tensors must share every dim except the last, and share dtype.
    """
    xs = list(xs)
    assert len(xs) >= 1
    lead_shape = xs[0].shape[:-1]
    dtype = xs[0].dtype
    for x in xs:
        assert x.shape[:-1] == lead_shape, "leading dims must match"
        assert x.dtype == dtype, "dtypes must match"

    widths = [int(x.shape[-1]) for x in xs]
    total_last = sum(widths)

    # ---- layout plumbing: flatten leading dims so rows pack the sublane axis ----
    rows = math.prod(lead_shape) if lead_shape else 1
    xs2d = [x.reshape(rows, w) for x, w in zip(xs, widths)]

    # ---- pick a row tile that fits the double-buffered VMEM budget ----
    itemsize = jnp.dtype(dtype).itemsize
    bytes_per_row = 2 * total_last * itemsize          # inputs + output per flattened row
    sub = _sublane_multiple(dtype)
    max_rows = max(sub, vmem_stage_budget_bytes // max(bytes_per_row, 1))
    if rows <= max_rows:
        rows_tile = rows                               # full dim -> any size allowed
    else:
        rows_tile = max(sub, (max_rows // sub) * sub)  # multiple of the sublane packing

    grid = (pl.cdiv(rows, rows_tile),)

    out2d = pl.pallas_call(
        _concat_last_dim_kernel,
        out_shape=jax.ShapeDtypeStruct((rows, total_last), dtype),
        grid=grid,
        in_specs=[
            pl.BlockSpec((rows_tile, w), lambda i: (i, 0)) for w in widths
        ],
        out_specs=pl.BlockSpec((rows_tile, total_last), lambda i: (i, 0)),
        compiler_params=pltpu.CompilerParams(
            # Row axis is independent -> let megacore (v7x: 2 TCs) split the copy.
            dimension_semantics=("parallel",),
            # Raise v5e's 16 MiB scoped default; still safely below v7x's 64 MiB physical.
            vmem_limit_bytes=32 * 1024 * 1024,
        ),
    )(*xs2d)

    return out2d.reshape(lead_shape + (total_last,))


if __name__ == "__main__":
    key = jax.random.PRNGKey(0)
    k1, k2, k3 = jax.random.split(key, 3)

    # Small NCHW-like tensors, differing only in the last dim.
    a = jax.random.normal(k1, (2, 4, 16, 16), dtype=jnp.float32)
    b = jax.random.normal(k2, (2, 4, 16, 8), dtype=jnp.float32)
    c = jax.random.normal(k3, (2, 4, 16, 32), dtype=jnp.float32)

    out = concatenate([a, b, c])
    out = jax.block_until_ready(out)

    # Correctness check against plain JAX concatenate (== torch.cat(..., dim=-1)).
    ref = jnp.concatenate([a, b, c], axis=-1)
    assert out.shape == ref.shape, (out.shape, ref.shape)
    assert jnp.allclose(out, ref), "mismatch vs reference concatenate"

    print("KERNEL_OK")
</pallas_src>

<mosaic_0001>
module attributes {stable_mosaic.version = 11 : i64} {
  func.func @_concat_last_dim_kernel(%arg0: i32, %arg1: memref<128x16xf32, #tpu.memory_space<vmem>>, %arg2: memref<128x8xf32, #tpu.memory_space<vmem>>, %arg3: memref<128x32xf32, #tpu.memory_space<vmem>>, %arg4: memref<128x56xf32, #tpu.memory_space<vmem>>) attributes {dimension_semantics = [#tpu.dimension_semantics<parallel>], iteration_bounds = array<i64: 1>, scalar_prefetch = 0 : i64, scratch_operands = 0 : i64, tpu.core_type = #tpu.core_type<tc>, window_params = [{transform_indices = @transform_0, window_bounds = array<i64: 128, 16>}, {transform_indices = @transform_1, window_bounds = array<i64: 128, 8>}, {transform_indices = @transform_2, window_bounds = array<i64: 128, 32>}, {transform_indices = @transform_3, window_bounds = array<i64: 128, 56>}]} {
    %c0 = arith.constant 0 : index
    %c0_0 = arith.constant 0 : index
    %0 = vector.load %arg1[%c0, %c0_0] : memref<128x16xf32, #tpu.memory_space<vmem>>, vector<128x16xf32>
    %c0_1 = arith.constant 0 : index
    %c0_2 = arith.constant 0 : index
    %1 = vector.load %arg2[%c0_1, %c0_2] : memref<128x8xf32, #tpu.memory_space<vmem>>, vector<128x8xf32>
    %c0_3 = arith.constant 0 : index
    %c0_4 = arith.constant 0 : index
    %2 = vector.load %arg3[%c0_3, %c0_4] : memref<128x32xf32, #tpu.memory_space<vmem>>, vector<128x32xf32>
    %3 = tpu.concatenate %0, %1, %2 in 1 : vector<128x16xf32>, vector<128x8xf32>, vector<128x32xf32> -> vector<128x56xf32>
    %c0_5 = arith.constant 0 : index
    %c0_6 = arith.constant 0 : index
    %4 = vector.load %arg4[%c0_5, %c0_6] : memref<128x56xf32, #tpu.memory_space<vmem>>, vector<128x56xf32>
    tpu.vector_store %arg4[%c0_5, %c0_6], %3 {strides = array<i32>} : memref<128x56xf32, #tpu.memory_space<vmem>>, vector<128x56xf32>,
    return
  }
  func.func @transform_0(%arg0: i32) -> (i32, i32) {
    %c0_i32 = arith.constant 0 : i32
    %c0_i32_0 = arith.constant 0 : i32
    return %arg0, %c0_i32 : i32, i32
  }
  func.func @transform_1(%arg0: i32) -> (i32, i32) {
    %c0_i32 = arith.constant 0 : i32
    %c0_i32_0 = arith.constant 0 : i32
    return %arg0, %c0_i32 : i32, i32
  }
  func.func @transform_2(%arg0: i32) -> (i32, i32) {
    %c0_i32 = arith.constant 0 : i32
    %c0_i32_0 = arith.constant 0 : i32
    return %arg0, %c0_i32 : i32, i32
  }
  func.func @transform_3(%arg0: i32) -> (i32, i32) {
    %c0_i32 = arith.constant 0 : i32
    %c0_i32_0 = arith.constant 0 : i32
    return %arg0, %c0_i32 : i32, i32
  }
}

</mosaic_0001>

<llo_original>
// kernel: tpu_custom_call.1
$region0: #{tpu_custom_call.1}
  #allocation0 [shape = 'u32[]', space=smem, size = 0x4, offset = 0x4, fixed_abs, tag = 'smem constant byte address 0x4 - core index']
  #allocation1 [shape = 'u32[144,128]{1,0:T(1,128)}', space=vmem, size = 0x12000, scoped, tag = 'internal scratch']
  %s0 = inlined_call_operand.vmem [shape: f32[128,16], index: 0, kind: input, shape index: {}]
  %s1 = inlined_call_operand.vmem [shape: f32[128,8], index: 1, kind: input, shape index: {}]
  %s2 = inlined_call_operand.vmem [shape: f32[128,32], index: 2, kind: input, shape index: {}]
  %s3 = inlined_call_operand.vmem [shape: f32[128,56], index: 3, kind: output, shape index: {}]
  %s4 = sld [smem:[#allocation0]]
  $region22: #{tpu_custom_call.1} parent=0
    _
  %s6 = ssub.s32 1, %s4
  %s7 = scalar_select 0, %s6, %s4
  // Predicated region
  $region2: #{tpu_custom_call.1} parent=0 // pred_check
    _
  $region3: #{tpu_custom_call.1} parent=0 // pred_check_branch
    %9 = sbr.rel (0) target = $region5
  $region4: #{tpu_custom_call.1} parent=0 // pred_region
    _
  $region5: #{tpu_custom_call.1} parent=0 // pred_fallthru
    _
  // Predicated region
  $region6: #{tpu_custom_call.1} parent=0 // pred_check
    _
  $region7: #{tpu_custom_call.1} parent=0 // pred_check_branch
    %11 = sbr.rel (0) target = $region9
  $region8: #{tpu_custom_call.1} parent=0 // pred_region
    _
  $region9: #{tpu_custom_call.1} parent=0 // pred_fallthru
    _
  // Predicated region
  $region10: #{tpu_custom_call.1} parent=0 // pred_check
    _
  $region11: #{tpu_custom_call.1} parent=0 // pred_check_branch
    %13 = sbr.rel (0) target = $region13
  $region12: #{tpu_custom_call.1} parent=0 // pred_region
    _
  $region13: #{tpu_custom_call.1} parent=0 // pred_fallthru
    _
  %v14 = vld [vmem:[%s0] sm:$0xff]
  %v15 = vld [vmem:[%s0 + $0x8] sm:$0xff]
  %v16 = vld [vmem:[%s0 + $0x10] sm:$0xff]
  %v17 = vld [vmem:[%s0 + $0x18] sm:$0xff]
  %v18 = vld [vmem:[%s0 + $0x20] sm:$0xff]
  %v19 = vld [vmem:[%s0 + $0x28] sm:$0xff]
  %v20 = vld [vmem:[%s0 + $0x30] sm:$0xff]
  %v21 = vld [vmem:[%s0 + $0x38] sm:$0xff]
  %v22 = vld [vmem:[%s0 + $0x40] sm:$0xff]
  %v23 = vld [vmem:[%s0 + $0x48] sm:$0xff]
  %v24 = vld [vmem:[%s0 + $0x50] sm:$0xff]
  %v25 = vld [vmem:[%s0 + $0x58] sm:$0xff]
  %v26 = vld [vmem:[%s0 + $0x60] sm:$0xff]
  %v27 = vld [vmem:[%s0 + $0x68] sm:$0xff]
  %v28 = vld [vmem:[%s0 + $0x70] sm:$0xff]
  %v29 = vld [vmem:[%s0 + $0x78] sm:$0xff]
  %v30 = vld [vmem:[%s1] sm:$0xff]
  %v31 = vld [vmem:[%s1 + $0x8] sm:$0xff]
  %v32 = vld [vmem:[%s1 + $0x10] sm:$0xff]
  %v33 = vld [vmem:[%s1 + $0x18] sm:$0xff]
  %v34 = vld [vmem:[%s1 + $0x20] sm:$0xff]
  %v35 = vld [vmem:[%s1 + $0x28] sm:$0xff]
  %v36 = vld [vmem:[%s1 + $0x30] sm:$0xff]
  %v37 = vld [vmem:[%s1 + $0x38] sm:$0xff]
  %v38 = vld [vmem:[%s1 + $0x40] sm:$0xff]
  %v39 = vld [vmem:[%s1 + $0x48] sm:$0xff]
  %v40 = vld [vmem:[%s1 + $0x50] sm:$0xff]
  %v41 = vld [vmem:[%s1 + $0x58] sm:$0xff]
  %v42 = vld [vmem:[%s1 + $0x60] sm:$0xff]
  %v43 = vld [vmem:[%s1 + $0x68] sm:$0xff]
  %v44 = vld [vmem:[%s1 + $0x70] sm:$0xff]
  %v45 = vld [vmem:[%s1 + $0x78] sm:$0xff]
  %v46 = vld [vmem:[%s2] sm:$0xff]
  %v47 = vld [vmem:[%s2 + $0x8] sm:$0xff]
  %v48 = vld [vmem:[%s2 + $0x10] sm:$0xff]
  %v49 = vld [vmem:[%s2 + $0x18] sm:$0xff]
  %v50 = vld [vmem:[%s2 + $0x20] sm:$0xff]
  %v51 = vld [vmem:[%s2 + $0x28] sm:$0xff]
  %v52 = vld [vmem:[%s2 + $0x30] sm:$0xff]
  %v53 = vld [vmem:[%s2 + $0x38] sm:$0xff]
  %v54 = vld [vmem:[%s2 + $0x40] sm:$0xff]
  %v55 = vld [vmem:[%s2 + $0x48] sm:$0xff]
  %v56 = vld [vmem:[%s2 + $0x50] sm:$0xff]
  %v57 = vld [vmem:[%s2 + $0x58] sm:$0xff]
  %v58 = vld [vmem:[%s2 + $0x60] sm:$0xff]
  %v59 = vld [vmem:[%s2 + $0x68] sm:$0xff]
  %v60 = vld [vmem:[%s2 + $0x70] sm:$0xff]
  %v61 = vld [vmem:[%s2 + $0x78] sm:$0xff]
  %78 = vrot.lane.b32.xlu0 %v30, 16
  %v79 = vpop.permute.xlu0 %78
  %80 = vrot.lane.b32.xlu0 %v31, 16
  %v81 = vpop.permute.xlu0 %80
  %82 = vrot.lane.b32.xlu0 %v32, 16
  %v83 = vpop.permute.xlu0 %82
  %84 = vrot.lane.b32.xlu0 %v33, 16
  %v85 = vpop.permute.xlu0 %84
  %86 = vrot.lane.b32.xlu0 %v34, 16
  %v87 = vpop.permute.xlu0 %86
  %88 = vrot.lane.b32.xlu0 %v35, 16
  %v89 = vpop.permute.xlu0 %88
  %90 = vrot.lane.b32.xlu0 %v36, 16
  %v91 = vpop.permute.xlu0 %90
  %92 = vrot.lane.b32.xlu0 %v37, 16
  %v93 = vpop.permute.xlu0 %92
  %94 = vrot.lane.b32.xlu0 %v38, 16
  %v95 = vpop.permute.xlu0 %94
  %96 = vrot.lane.b32.xlu0 %v39, 16
  %v97 = vpop.permute.xlu0 %96
  %98 = vrot.lane.b32.xlu0 %v40, 16
  %v99 = vpop.permute.xlu0 %98
  %100 = vrot.lane.b32.xlu0 %v41, 16
  %v101 = vpop.permute.xlu0 %100
  %102 = vrot.lane.b32.xlu0 %v42, 16
  %v103 = vpop.permute.xlu0 %102
  %104 = vrot.lane.b32.xlu0 %v43, 16
  %v105 = vpop.permute.xlu0 %104
  %106 = vrot.lane.b32.xlu0 %v44, 16
  %v107 = vpop.permute.xlu0 %106
  %108 = vrot.lane.b32.xlu0 %v45, 16
  %v109 = vpop.permute.xlu0 %108
  %142 = vrot.lane.b32.xlu0 %v46, 24
  %v143 = vpop.permute.xlu0 %142
  %144 = vrot.lane.b32.xlu0 %v47, 24
  %v145 = vpop.permute.xlu0 %144
  %146 = vrot.lane.b32.xlu0 %v48, 24
  %v147 = vpop.permute.xlu0 %146
  %148 = vrot.lane.b32.xlu0 %v49, 24
  %v149 = vpop.permute.xlu0 %148
  %150 = vrot.lane.b32.xlu0 %v50, 24
  %v151 = vpop.permute.xlu0 %150
  %152 = vrot.lane.b32.xlu0 %v51, 24
  %v153 = vpop.permute.xlu0 %152
  %154 = vrot.lane.b32.xlu0 %v52, 24
  %v155 = vpop.permute.xlu0 %154
  %156 = vrot.lane.b32.xlu0 %v53, 24
  %v157 = vpop.permute.xlu0 %156
  %158 = vrot.lane.b32.xlu0 %v54, 24
  %v159 = vpop.permute.xlu0 %158
  %160 = vrot.lane.b32.xlu0 %v55, 24
  %v161 = vpop.permute.xlu0 %160
  %162 = vrot.lane.b32.xlu0 %v56, 24
  %v163 = vpop.permute.xlu0 %162
  %164 = vrot.lane.b32.xlu0 %v57, 24
  %v165 = vpop.permute.xlu0 %164
  %166 = vrot.lane.b32.xlu0 %v58, 24
  %v167 = vpop.permute.xlu0 %166
  %168 = vrot.lane.b32.xlu0 %v59, 24
  %v169 = vpop.permute.xlu0 %168
  %170 = vrot.lane.b32.xlu0 %v60, 24
  %v171 = vpop.permute.xlu0 %170
  %172 = vrot.lane.b32.xlu0 %v61, 24
  %v173 = vpop.permute.xlu0 %172
  %vm190 = vcmask 130048
  %v191 = vsel %vm190, %v14, %v79
  %v192 = vsel %vm190, %v15, %v81
  %v193 = vsel %vm190, %v16, %v83
  %v194 = vsel %vm190, %v17, %v85
  %v195 = vsel %vm190, %v18, %v87
  %v196 = vsel %vm190, %v19, %v89
  %v197 = vsel %vm190, %v20, %v91
  %v198 = vsel %vm190, %v21, %v93
  %v199 = vsel %vm190, %v22, %v95
  %v200 = vsel %vm190, %v23, %v97
  %v201 = vsel %vm190, %v24, %v99
  %v202 = vsel %vm190, %v25, %v101
  %v203 = vsel %vm190, %v26, %v103
  %v204 = vsel %vm190, %v27, %v105
  %v205 = vsel %vm190, %v28, %v107
  %v206 = vsel %vm190, %v29, %v109
  %vm207 = vcmask 195584
  %v208 = vsel %vm207, %v191, %v143
  %v209 = vsel %vm207, %v192, %v145
  %v210 = vsel %vm207, %v193, %v147
  %v211 = vsel %vm207, %v194, %v149
  %v212 = vsel %vm207, %v195, %v151
  %v213 = vsel %vm207, %v196, %v153
  %v214 = vsel %vm207, %v197, %v155
  %v215 = vsel %vm207, %v198, %v157
  %v216 = vsel %vm207, %v199, %v159
  %v217 = vsel %vm207, %v200, %v161
  %v218 = vsel %vm207, %v201, %v163
  %v219 = vsel %vm207, %v202, %v165
  %v220 = vsel %vm207, %v203, %v167
  %v221 = vsel %vm207, %v204, %v169
  %v222 = vsel %vm207, %v205, %v171
  %v223 = vsel %vm207, %v206, %v173
  %vm224 = vcmask 457728
  %225 = vst.msk [vmem:[%s3] sm:$0xff] %vm224, %v208
  %226 = vst.msk [vmem:[%s3 + $0x8] sm:$0xff] %vm224, %v209
  %227 = vst.msk [vmem:[%s3 + $0x10] sm:$0xff] %vm224, %v210
  %228 = vst.msk [vmem:[%s3 + $0x18] sm:$0xff] %vm224, %v211
  %229 = vst.msk [vmem:[%s3 + $0x20] sm:$0xff] %vm224, %v212
  %230 = vst.msk [vmem:[%s3 + $0x28] sm:$0xff] %vm224, %v213
  %231 = vst.msk [vmem:[%s3 + $0x30] sm:$0xff] %vm224, %v214
  %232 = vst.msk [vmem:[%s3 + $0x38] sm:$0xff] %vm224, %v215
  %233 = vst.msk [vmem:[%s3 + $0x40] sm:$0xff] %vm224, %v216
  %234 = vst.msk [vmem:[%s3 + $0x48] sm:$0xff] %vm224, %v217
  %235 = vst.msk [vmem:[%s3 + $0x50] sm:$0xff] %vm224, %v218
  %236 = vst.msk [vmem:[%s3 + $0x58] sm:$0xff] %vm224, %v219
  %237 = vst.msk [vmem:[%s3 + $0x60] sm:$0xff] %vm224, %v220
  %238 = vst.msk [vmem:[%s3 + $0x68] sm:$0xff] %vm224, %v221
  %239 = vst.msk [vmem:[%s3 + $0x70] sm:$0xff] %vm224, %v222
  %240 = vst.msk [vmem:[%s3 + $0x78] sm:$0xff] %vm224, %v223
  // Predicated region
  $region14: #{tpu_custom_call.1} parent=0 // pred_check
    _
  $region15: #{tpu_custom_call.1} parent=0 // pred_check_branch
    %242 = sbr.rel (0) target = $region17
  $region16: #{tpu_custom_call.1} parent=0 // pred_region
    _
  $region17: #{tpu_custom_call.1} parent=0 // pred_fallthru
    _
  // Predicated region
  $region18: #{tpu_custom_call.1} parent=0 // pred_check
    _
  $region19: #{tpu_custom_call.1} parent=0 // pred_check_branch
    %244 = sbr.rel (0) target = $region21
  $region20: #{tpu_custom_call.1} parent=0 // pred_region
    _
  $region21: #{tpu_custom_call.1} parent=0 // pred_fallthru
    _

</llo_original>
